<compile_context>
chip_gen: v6e
topology: v6e:2x2x1
jax: 0.10.0
libtpu: 0.0.40
codegen_flags: <defaults>
</compile_context>

<pallas_src>
import numpy as np
import jax
import jax.numpy as jnp
from jax.experimental import pallas as pl
from jax.experimental.pallas import tpu as pltpu


def _rup(x, m):
    return ((x + m - 1) // m) * m


_NEG = -1.0e30  # finite "-inf": masks unused gate lanes (exp -> 0.0 exactly, no NaNs)


# ----------------------------------------------------------------------------
# Host-side parameter packing (done once per instance): two lane-aligned slabs
# ----------------------------------------------------------------------------
def pack_extraction_params(params):
    f32 = np.float32
    w1s = np.asarray(params["w1s"], f32); b1s = np.asarray(params["b1s"], f32)
    w2s = np.asarray(params["w2s"], f32); b2s = np.asarray(params["b2s"], f32)
    w1t = np.asarray(params["w1t"], f32); b1t = np.asarray(params["b1t"], f32)
    w2t = np.asarray(params["w2t"], f32); b2t = np.asarray(params["b2t"], f32)
    wg  = np.asarray(params["wg"],  f32); bg  = np.asarray(params["bg"],  f32)
    wsg = np.asarray(params["wsg"], f32); bsg = np.asarray(params["bsg"], f32)

    Es, Din, H = w1s.shape
    T, Ep = w1t.shape[0], w1t.shape[1]
    Dout = w2s.shape[-1]
    E_tot = Es + T * Ep                      # global expert order: [shared..., task0..., task1...]
    Gs = Es + Ep * T                         # shared-gate width
    Gt = Es + Ep                             # task-gate width
    n_in = (1 + T) * Din                     # [shared | task0 | task1 ...]
    ONE = n_in                               # constant-one input lane (layer-1 bias trick)
    n_in_pad = _rup(n_in + 1, 8)

    HB = 128                                 # hidden block (lanes [0, HB))
    GB = 128                                 # one 128-lane block per gate group
    one_hid = E_tot * H                      # constant-one hidden lane (layer-2 bias trick)
    assert E_tot * H + 1 <= HB and Gs <= GB and Gt <= GB
    C1 = HB + (1 + T) * GB                   # z1 layout: [hidden | shared gate | task gates...]
    C2 = E_tot * Dout
    CE = _rup((1 + T) * C2, 128)             # expanded layout, group k = (shared, task0, task1,...)
    CO = _rup((1 + T) * Dout, 128)           # lane-dense output, group k at lanes [k*Dout, ...)
    WB = max(CE, CO)

    def gidx(t, e):
        return Es + t * Ep + e

    w2_all = [w2s[e] for e in range(Es)] + [w2t[t, e] for t in range(T) for e in range(Ep)]
    b2_all = [b2s[e, 0] for e in range(Es)] + [b2t[t, e, 0] for t in range(T) for e in range(Ep)]

    # ---- slab_a: fused layer-1 weight (experts + gates), biases via the ONE lane ----
    W1 = np.zeros((n_in_pad, C1), f32)
    for e in range(Es):                                   # shared stream -> shared experts
        W1[0:Din, e * H:(e + 1) * H] = w1s[e]
        W1[ONE, e * H:(e + 1) * H] = b1s[e, 0]
    for t in range(T):                                    # task streams -> specific experts
        r0 = (1 + t) * Din
        for e in range(Ep):
            g = gidx(t, e)
            W1[r0:r0 + Din, g * H:(g + 1) * H] = w1t[t, e]
            W1[ONE, g * H:(g + 1) * H] = b1t[t, e, 0]
    W1[ONE, one_hid] = 1.0                                # constant-one hidden lane
    W1[0:Din, HB:HB + Gs] = wsg                           # shared gate block
    W1[ONE, HB:HB + Gs] = bsg[0]
    W1[ONE, HB + Gs:HB + GB] = _NEG                       # mask unused lanes of the block
    for t in range(T):                                    # task gate blocks
        c0 = HB + (1 + t) * GB
        r0 = (1 + t) * Din
        W1[r0:r0 + Din, c0:c0 + Gt] = wg[t]
        W1[ONE, c0:c0 + Gt] = bg[t, 0]
        W1[ONE, c0 + Gt:c0 + GB] = _NEG

    # ---- slab_b: [ W2rep | R blocks (native gate order) | S ] ----
    RB = HB + (1 + T) * GB + CE
    slab_b = np.zeros((RB, WB), f32)

    W2rep = slab_b[0:HB]                                  # layer-2, replicated per output group
    for k in range(1 + T):                                # k=0 shared output, k=1+t task t
        for g in range(E_tot):
            c = k * C2 + g * Dout
            W2rep[g * H:(g + 1) * H, c:c + Dout] = w2_all[g]
            W2rep[one_hid, c:c + Dout] = b2_all[g]        # layer-2 bias via the one-lane

    # R block 0: shared gate (gate order == global expert order) -> output group 0
    for i in range(Gs):
        slab_b[HB + i, i * Dout:(i + 1) * Dout] = 1.0
    # R block 1+t: task-t gate (order: shared experts, then own specific) -> group 1+t
    for t in range(T):
        r0 = HB + (1 + t) * GB
        for i in range(Gt):
            g = i if i < Es else gidx(t, i - Es)
            c = (1 + t) * C2 + g * Dout
            slab_b[r0 + i, c:c + Dout] = 1.0

    # S: grouped lane-sum (stacked Dout identities per output group)
    s0 = HB + (1 + T) * GB
    eye = np.eye(Dout, dtype=f32)
    for k in range(1 + T):
        for g in range(E_tot):
            slab_b[s0 + k * C2 + g * Dout: s0 + k * C2 + (g + 1) * Dout,
                   k * Dout:(k + 1) * Dout] = eye

    layout = dict(Din=Din, H=H, Dout=Dout, Es=Es, Ep=Ep, T=T, E_tot=E_tot,
                  Gs=Gs, Gt=Gt, n_in=n_in, n_in_pad=n_in_pad, ONE=ONE,
                  HB=HB, GB=GB, C1=C1, C2=C2, CE=CE, CO=CO, RB=RB, WB=WB)
    return jnp.asarray(W1), jnp.asarray(slab_b), layout


# ----------------------------------------------------------------------------
# Pallas kernel: whole ExtractionNet forward, lane-aligned, concat-free
# ----------------------------------------------------------------------------
def _make_kernel(layout):
    lo = layout
    HB, GB, T = lo["HB"], lo["GB"], lo["T"]
    CE, CO = lo["CE"], lo["CO"]
    s0 = HB + (1 + T) * GB

    def kernel(x_ref, a_ref, b_ref, o_ref):
        x = x_ref[...]                                                 # [TB, n_in_pad]
        # Layer 1 of every expert + every gate in one matmul (biases folded in).
        z1 = jnp.dot(x, a_ref[...], preferred_element_type=jnp.float32)   # [TB, C1]

        # ReLU'd hidden block (constant-one lane stays 1); layer 2 of every
        # expert, already replicated onto the (T+1) output groups: one matmul.
        h = jnp.maximum(z1[:, 0:HB], 0.0)
        e_tiled = jnp.dot(h, b_ref[0:HB, 0:CE],
                          preferred_element_type=jnp.float32)              # [TB, CE]

        # Per-gate softmax, each on its own aligned 128-lane block.  Unused
        # lanes carry a -1e30 bias -> exp()==0, so no masking is needed and
        # the padded lanes contribute nothing.  Gate weights are expanded onto
        # the expert lane layout with tiny 0/1 matmuls (no lane concats).
        gw_exp = jnp.zeros_like(e_tiled)
        for j in range(1 + T):                         # j=0 shared gate, j=1+t task-t gate
            logits = z1[:, HB + j * GB: HB + (j + 1) * GB]
            m = jnp.max(logits, axis=1, keepdims=True)
            e = jnp.exp(logits - m)
            gw = e / jnp.sum(e, axis=1, keepdims=True)   # exact div: keeps 1e-4 tolerance
            Rj = b_ref[HB + j * GB: HB + (j + 1) * GB, 0:CE]
            gw_exp = gw_exp + jnp.dot(gw, Rj, preferred_element_type=jnp.float32)

        # Gate-weighted mixing for all tasks + shared rep: elementwise product
        # + grouped lane-sum matmul, stored lane-dense (CO is a multiple of 128).
        o_ref[...] = jnp.dot(gw_exp * e_tiled, b_ref[s0:s0 + CE, 0:CO],
                             preferred_element_type=jnp.float32)

    return kernel


# ----------------------------------------------------------------------------
# Wrapper: one pallas_call for L stacked instances x batch tiles
# ----------------------------------------------------------------------------
def extraction_net(task_reps, shared_rep, slab_a, slab_b, layout, *, batch_tile=256):
    """Fused ExtractionNet forward.

    task_reps  : [L, T, B, Din]  (or [T, B, Din] for a single instance)
    shared_rep : [L, B, Din]     (or [B, Din])
    slab_a     : [L, n_in_pad, C1]   slab_b : [L, RB, WB]   (or unstacked)
    Returns (new_task [L, T, B, Dout], new_shared [L, B, Dout]); leading L is
    dropped if the inputs were unstacked.
    """
    single = (shared_rep.ndim == 2)
    if single:
        task_reps, shared_rep = task_reps[None], shared_rep[None]
        slab_a, slab_b = slab_a[None], slab_b[None]

    Lc, T, B, Din = task_reps.shape
    n_in, n_in_pad = layout["n_in"], layout["n_in_pad"]
    C1, RB, WB = layout["C1"], layout["RB"], layout["WB"]
    CO, Dout = layout["CO"], layout["Dout"]

    TB = min(_rup(B, 8), _rup(batch_tile, 8))      # batch tile (multiple of 8 sublanes)
    Bpad = _rup(B, TB)

    # Lane-concatenate activations + constant-one bias lane (free layout plumbing).
    x = jnp.concatenate(
        [shared_rep] + [task_reps[:, t] for t in range(T)]
        + [jnp.ones((Lc, B, 1), jnp.float32),
           jnp.zeros((Lc, B, n_in_pad - n_in - 1), jnp.float32)], axis=2)
    if Bpad != B:
        x = jnp.pad(x, ((0, 0), (0, Bpad - B), (0, 0)))

    grid = (Lc, Bpad // TB)
    flops_per_row = 2 * (n_in_pad * C1 + layout["HB"] * layout["CE"]
                         + (1 + T) * layout["GB"] * layout["CE"] + layout["CE"] * CO)
    cost = pl.CostEstimate(
        flops=int(Lc * Bpad * flops_per_row),
        transcendentals=int(Lc * Bpad * (1 + T) * layout["GB"]),
        bytes_accessed=int(4 * (x.size + slab_a.size + slab_b.size + Lc * Bpad * CO)))

    out = pl.pallas_call(
        _make_kernel(layout),
        out_shape=jax.ShapeDtypeStruct((Lc, Bpad, CO), jnp.float32),
        grid_spec=pltpu.PrefetchScalarGridSpec(
            num_scalar_prefetch=0,
            grid=grid,
            in_specs=[
                pl.BlockSpec((None, TB, n_in_pad), lambda l, i: (l, i, 0)),
                # Parameter slabs: constant block along the batch-tile axis ->
                # DMA'd once per instance, resident in VMEM across batch tiles.
                pl.BlockSpec((None, n_in_pad, C1), lambda l, i: (l, 0, 0)),
                pl.BlockSpec((None, RB, WB), lambda l, i: (l, 0, 0)),
            ],
            out_specs=pl.BlockSpec((None, TB, CO), lambda l, i: (l, i, 0)),
        ),
        compiler_params=pltpu.CompilerParams(
            dimension_semantics=("parallel", "parallel")),   # uses both TCs on v7x
        cost_estimate=cost,
    )(x, slab_a, slab_b)

    out = out[:, :B, :]
    new_shared = out[:, :, 0:Dout]                                         # group 0
    new_task = jnp.stack([out[:, :, (1 + t) * Dout:(2 + t) * Dout]
                          for t in range(T)], axis=1)                      # groups 1..T
    if single:
        return new_task[0], new_shared[0]
    return new_task, new_shared


# ----------------------------------------------------------------------------
# Pure-JAX reference (mirrors the PyTorch forward)
# ----------------------------------------------------------------------------
def extraction_net_ref(task_reps, shared_rep, params):
    T, Ep = params["w1t"].shape[0], params["w1t"].shape[1]
    Es = params["w1s"].shape[0]

    def expert(x, w1, b1, w2, b2):
        return jnp.maximum(x @ w1 + b1, 0.0) @ w2 + b2

    shared_outs = [expert(shared_rep, params["w1s"][e], params["b1s"][e],
                          params["w2s"][e], params["b2s"][e]) for e in range(Es)]
    new_task_reps, all_outs = [], list(shared_outs)
    for t in range(T):
        xt = task_reps[t]
        task_outs = [expert(xt, params["w1t"][t, e], params["b1t"][t, e],
                            params["w2t"][t, e], params["b2t"][t, e]) for e in range(Ep)]
        experts = jnp.stack(shared_outs + task_outs, axis=0)
        gw = jax.nn.softmax(xt @ params["wg"][t] + params["bg"][t], axis=1)
        new_task_reps.append(jnp.einsum("ebd,be->bd", experts, gw))
        all_outs = all_outs + task_outs
    all_experts = jnp.stack(all_outs, axis=0)
    sgw = jax.nn.softmax(shared_rep @ params["wsg"] + params["bsg"], axis=1)
    new_shared = jnp.einsum("ebd,be->bd", all_experts, sgw)
    return jnp.stack(new_task_reps, axis=0), new_shared


# ----------------------------------------------------------------------------
# Main
# ----------------------------------------------------------------------------
if __name__ == "__main__":
    # ModelArgs defaults: input_dim=4, expert_hidden_dim=8, expert_dim=4,
    # num_specific_experts=2, num_shared_experts=2, num_tasks=2
    B, Din, H, Dout = 8, 4, 8, 4
    Es, Ep, T = 2, 2, 2
    L = 2   # two stacked layer instances -> one pallas_call amortizes the launch

    key = jax.random.PRNGKey(0)
    inst_keys = jax.random.split(key, L + 1)
    f32 = jnp.float32

    def make_params(k):
        ks = jax.random.split(k, 12)
        return {
            "w1s": 0.2 * jax.random.normal(ks[0], (Es, Din, H), f32),
            "b1s": 0.1 * jax.random.normal(ks[1], (Es, 1, H), f32),
            "w2s": 0.2 * jax.random.normal(ks[2], (Es, H, Dout), f32),
            "b2s": 0.1 * jax.random.normal(ks[3], (Es, 1, Dout), f32),
            "w1t": 0.2 * jax.random.normal(ks[4], (T, Ep, Din, H), f32),
            "b1t": 0.1 * jax.random.normal(ks[5], (T, Ep, 1, H), f32),
            "w2t": 0.2 * jax.random.normal(ks[6], (T, Ep, H, Dout), f32),
            "b2t": 0.1 * jax.random.normal(ks[7], (T, Ep, 1, Dout), f32),
            "wg":  0.2 * jax.random.normal(ks[8], (T, Din, Es + Ep), f32),
            "bg":  0.1 * jax.random.normal(ks[9], (T, 1, Es + Ep), f32),
            "wsg": 0.2 * jax.random.normal(ks[10], (Din, Es + Ep * T), f32),
            "bsg": 0.1 * jax.random.normal(ks[11], (1, Es + Ep * T), f32),
        }

    params_list = [make_params(inst_keys[l]) for l in range(L)]
    packed = [pack_extraction_params(p) for p in params_list]
    layout = packed[0][2]
    slab_a = jnp.stack([p[0] for p in packed], axis=0)     # [L, n_in_pad, C1]
    slab_b = jnp.stack([p[1] for p in packed], axis=0)     # [L, RB, WB]

    dks = jax.random.split(inst_keys[-1], 2)
    task_reps = jax.random.normal(dks[0], (L, T, B, Din), f32)
    shared_rep = jax.random.normal(dks[1], (L, B, Din), f32)

    new_task, new_shared = extraction_net(task_reps, shared_rep, slab_a, slab_b, layout)
    new_task = jax.block_until_ready(new_task)
    new_shared = jax.block_until_ready(new_shared)

    ok = True
    for l in range(L):
        ref_task, ref_shared = extraction_net_ref(task_reps[l], shared_rep[l], params_list[l])
        ok = ok and bool(jnp.allclose(new_task[l], ref_task, atol=1e-4, rtol=1e-4))
        ok = ok and bool(jnp.allclose(new_shared[l], ref_shared, atol=1e-4, rtol=1e-4))
    assert ok, "mismatch vs pure-JAX reference"

    print("KERNEL_OK")
</pallas_src>

<mosaic_0001>
module attributes {stable_mosaic.version = 11 : i64} {
  func.func @kernel(%arg0: i32, %arg1: i32, %arg2: memref<1x8x16xf32, #tpu.memory_space<vmem>>, %arg3: memref<1x16x512xf32, #tpu.memory_space<vmem>>, %arg4: memref<1x640x128xf32, #tpu.memory_space<vmem>>, %arg5: memref<1x8x128xf32, #tpu.memory_space<vmem>>) attributes {dimension_semantics = [#tpu.dimension_semantics<parallel>, #tpu.dimension_semantics<parallel>], iteration_bounds = array<i64: 2, 1>, scalar_prefetch = 0 : i64, scratch_operands = 0 : i64, tpu.core_type = #tpu.core_type<tc>, window_params = [{transform_indices = @transform_0, window_bounds = array<i64: 1, 8, 16>}, {transform_indices = @transform_1, window_bounds = array<i64: 1, 16, 512>}, {transform_indices = @transform_2, window_bounds = array<i64: 1, 640, 128>}, {transform_indices = @transform_3, window_bounds = array<i64: 1, 8, 128>}]} {
    %c0 = arith.constant 0 : index
    %c0_0 = arith.constant 0 : index
    %c0_1 = arith.constant 0 : index
    %0 = vector.load %arg2[%c0, %c0_0, %c0_1] : memref<1x8x16xf32, #tpu.memory_space<vmem>>, vector<1x8x16xf32>
    %1 = vector.shape_cast %0 : vector<1x8x16xf32> to vector<8x16xf32>
    %c0_2 = arith.constant 0 : index
    %c0_3 = arith.constant 0 : index
    %c0_4 = arith.constant 0 : index
    %2 = vector.load %arg3[%c0_2, %c0_3, %c0_4] : memref<1x16x512xf32, #tpu.memory_space<vmem>>, vector<1x16x512xf32>
    %3 = vector.shape_cast %2 : vector<1x16x512xf32> to vector<16x512xf32>
    %cst = arith.constant dense<0.000000e+00> : vector<8x512xf32>
    %4 = tpu.matmul %1, %3, %cst {dimension_numbers = #tpu.dot_dimension_numbers<[1], [0], [0], [1], [0, 0, 1, 1], [], []>} : vector<8x16xf32>, vector<16x512xf32>, vector<8x512xf32> -> vector<8x512xf32>
    %5 = vector.extract_strided_slice %4 {offsets = [0, 0], sizes = [8, 128], strides = [1, 1]} : vector<8x512xf32> to vector<8x128xf32>
    %cst_5 = arith.constant 0.000000e+00 : f32
    %6 = vector.broadcast %cst_5 : f32 to vector<8x128xf32>
    %7 = arith.maximumf %5, %6 : vector<8x128xf32>
    %c0_6 = arith.constant 0 : index
    %c0_7 = arith.constant 0 : index
    %c0_8 = arith.constant 0 : index
    %8 = vector.load %arg4[%c0_6, %c0_7, %c0_8] : memref<1x640x128xf32, #tpu.memory_space<vmem>>, vector<1x128x128xf32>
    %9 = vector.shape_cast %8 : vector<1x128x128xf32> to vector<128x128xf32>
    %cst_9 = arith.constant dense<0.000000e+00> : vector<8x128xf32>
    %10 = tpu.matmul %7, %9, %cst_9 {dimension_numbers = #tpu.dot_dimension_numbers<[1], [0], [0], [1], [0, 0, 1, 1], [], []>} : vector<8x128xf32>, vector<128x128xf32>, vector<8x128xf32> -> vector<8x128xf32>
    %cst_10 = arith.constant 0.000000e+00 : f32
    %11 = vector.broadcast %cst_10 : f32 to vector<8x128xf32>
    %12 = vector.extract_strided_slice %4 {offsets = [0, 128], sizes = [8, 128], strides = [1, 1]} : vector<8x512xf32> to vector<8x128xf32>
    %cst_11 = arith.constant dense<0xFF800000> : vector<8xf32>
    %13 = vector.multi_reduction <maximumf>, %12, %cst_11 [1] : vector<8x128xf32> to vector<8xf32>
    %14 = vector.shape_cast %13 : vector<8xf32> to vector<8x1xf32>
    %15 = vector.broadcast %14 : vector<8x1xf32> to vector<8x128xf32>
    %16 = arith.subf %12, %15 : vector<8x128xf32>
    %17 = math.exp %16 : vector<8x128xf32>
    %cst_12 = arith.constant dense<0.000000e+00> : vector<8xf32>
    %18 = vector.multi_reduction <add>, %17, %cst_12 [1] : vector<8x128xf32> to vector<8xf32>
    %19 = vector.shape_cast %18 : vector<8xf32> to vector<8x1xf32>
    %20 = vector.broadcast %19 : vector<8x1xf32> to vector<8x128xf32>
    %21 = arith.divf %17, %20 : vector<8x128xf32>
    %c0_13 = arith.constant 0 : index
    %c128 = arith.constant 128 : index
    %c0_14 = arith.constant 0 : index
    %22 = vector.load %arg4[%c0_13, %c128, %c0_14] : memref<1x640x128xf32, #tpu.memory_space<vmem>>, vector<1x128x128xf32>
    %23 = vector.shape_cast %22 : vector<1x128x128xf32> to vector<128x128xf32>
    %cst_15 = arith.constant dense<0.000000e+00> : vector<8x128xf32>
    %24 = tpu.matmul %21, %23, %cst_15 {dimension_numbers = #tpu.dot_dimension_numbers<[1], [0], [0], [1], [0, 0, 1, 1], [], []>} : vector<8x128xf32>, vector<128x128xf32>, vector<8x128xf32> -> vector<8x128xf32>
    %25 = arith.addf %11, %24 : vector<8x128xf32>
    %26 = vector.extract_strided_slice %4 {offsets = [0, 256], sizes = [8, 128], strides = [1, 1]} : vector<8x512xf32> to vector<8x128xf32>
    %cst_16 = arith.constant dense<0xFF800000> : vector<8xf32>
    %27 = vector.multi_reduction <maximumf>, %26, %cst_16 [1] : vector<8x128xf32> to vector<8xf32>
    %28 = vector.shape_cast %27 : vector<8xf32> to vector<8x1xf32>
    %29 = vector.broadcast %28 : vector<8x1xf32> to vector<8x128xf32>
    %30 = arith.subf %26, %29 : vector<8x128xf32>
    %31 = math.exp %30 : vector<8x128xf32>
    %cst_17 = arith.constant dense<0.000000e+00> : vector<8xf32>
    %32 = vector.multi_reduction <add>, %31, %cst_17 [1] : vector<8x128xf32> to vector<8xf32>
    %33 = vector.shape_cast %32 : vector<8xf32> to vector<8x1xf32>
    %34 = vector.broadcast %33 : vector<8x1xf32> to vector<8x128xf32>
    %35 = arith.divf %31, %34 : vector<8x128xf32>
    %c0_18 = arith.constant 0 : index
    %c256 = arith.constant 256 : index
    %c0_19 = arith.constant 0 : index
    %36 = vector.load %arg4[%c0_18, %c256, %c0_19] : memref<1x640x128xf32, #tpu.memory_space<vmem>>, vector<1x128x128xf32>
    %37 = vector.shape_cast %36 : vector<1x128x128xf32> to vector<128x128xf32>
    %cst_20 = arith.constant dense<0.000000e+00> : vector<8x128xf32>
    %38 = tpu.matmul %35, %37, %cst_20 {dimension_numbers = #tpu.dot_dimension_numbers<[1], [0], [0], [1], [0, 0, 1, 1], [], []>} : vector<8x128xf32>, vector<128x128xf32>, vector<8x128xf32> -> vector<8x128xf32>
    %39 = arith.addf %25, %38 : vector<8x128xf32>
    %40 = vector.extract_strided_slice %4 {offsets = [0, 384], sizes = [8, 128], strides = [1, 1]} : vector<8x512xf32> to vector<8x128xf32>
    %cst_21 = arith.constant dense<0xFF800000> : vector<8xf32>
    %41 = vector.multi_reduction <maximumf>, %40, %cst_21 [1] : vector<8x128xf32> to vector<8xf32>
    %42 = vector.shape_cast %41 : vector<8xf32> to vector<8x1xf32>
    %43 = vector.broadcast %42 : vector<8x1xf32> to vector<8x128xf32>
    %44 = arith.subf %40, %43 : vector<8x128xf32>
    %45 = math.exp %44 : vector<8x128xf32>
    %cst_22 = arith.constant dense<0.000000e+00> : vector<8xf32>
    %46 = vector.multi_reduction <add>, %45, %cst_22 [1] : vector<8x128xf32> to vector<8xf32>
    %47 = vector.shape_cast %46 : vector<8xf32> to vector<8x1xf32>
    %48 = vector.broadcast %47 : vector<8x1xf32> to vector<8x128xf32>
    %49 = arith.divf %45, %48 : vector<8x128xf32>
    %c0_23 = arith.constant 0 : index
    %c384 = arith.constant 384 : index
    %c0_24 = arith.constant 0 : index
    %50 = vector.load %arg4[%c0_23, %c384, %c0_24] : memref<1x640x128xf32, #tpu.memory_space<vmem>>, vector<1x128x128xf32>
    %51 = vector.shape_cast %50 : vector<1x128x128xf32> to vector<128x128xf32>
    %cst_25 = arith.constant dense<0.000000e+00> : vector<8x128xf32>
    %52 = tpu.matmul %49, %51, %cst_25 {dimension_numbers = #tpu.dot_dimension_numbers<[1], [0], [0], [1], [0, 0, 1, 1], [], []>} : vector<8x128xf32>, vector<128x128xf32>, vector<8x128xf32> -> vector<8x128xf32>
    %53 = arith.addf %39, %52 : vector<8x128xf32>
    %54 = arith.mulf %53, %10 : vector<8x128xf32>
    %c0_26 = arith.constant 0 : index
    %c512 = arith.constant 512 : index
    %c0_27 = arith.constant 0 : index
    %55 = vector.load %arg4[%c0_26, %c512, %c0_27] : memref<1x640x128xf32, #tpu.memory_space<vmem>>, vector<1x128x128xf32>
    %56 = vector.shape_cast %55 : vector<1x128x128xf32> to vector<128x128xf32>
    %cst_28 = arith.constant dense<0.000000e+00> : vector<8x128xf32>
    %57 = tpu.matmul %54, %56, %cst_28 {dimension_numbers = #tpu.dot_dimension_numbers<[1], [0], [0], [1], [0, 0, 1, 1], [], []>} : vector<8x128xf32>, vector<128x128xf32>, vector<8x128xf32> -> vector<8x128xf32>
    %c0_29 = arith.constant 0 : index
    %c0_30 = arith.constant 0 : index
    %c0_31 = arith.constant 0 : index
    %58 = vector.load %arg5[%c0_29, %c0_30, %c0_31] : memref<1x8x128xf32, #tpu.memory_space<vmem>>, vector<1x8x128xf32>
    %59 = vector.shape_cast %58 : vector<1x8x128xf32> to vector<8x128xf32>
    %60 = vector.shape_cast %57 : vector<8x128xf32> to vector<1x8x128xf32>
    tpu.vector_store %arg5[%c0_29, %c0_30, %c0_31], %60 {strides = array<i32>} : memref<1x8x128xf32, #tpu.memory_space<vmem>>, vector<1x8x128xf32>,
    return
  }
  func.func @transform_0(%arg0: i32, %arg1: i32) -> (i32, i32, i32) {
    %c0_i32 = arith.constant 0 : i32
    %c0_i32_0 = arith.constant 0 : i32
    return %arg0, %arg1, %c0_i32 : i32, i32, i32
  }
  func.func @transform_1(%arg0: i32, %arg1: i32) -> (i32, i32, i32) {
    %c0_i32 = arith.constant 0 : i32
    %c0_i32_0 = arith.constant 0 : i32
    %c0_i32_1 = arith.constant 0 : i32
    return %arg0, %c0_i32, %c0_i32_0 : i32, i32, i32
  }
  func.func @transform_2(%arg0: i32, %arg1: i32) -> (i32, i32, i32) {
    %c0_i32 = arith.constant 0 : i32
    %c0_i32_0 = arith.constant 0 : i32
    %c0_i32_1 = arith.constant 0 : i32
    return %arg0, %c0_i32, %c0_i32_0 : i32, i32, i32
  }
  func.func @transform_3(%arg0: i32, %arg1: i32) -> (i32, i32, i32) {
    %c0_i32 = arith.constant 0 : i32
    %c0_i32_0 = arith.constant 0 : i32
    return %arg0, %arg1, %c0_i32 : i32, i32, i32
  }
}

</mosaic_0001>

<llo_original>
// kernel: tpu_custom_call.1
$region0: #{tpu_custom_call.1}
  #allocation0 [shape = 'u32[]', space=smem, size = 0x4, offset = 0x4, fixed_abs, tag = 'smem constant byte address 0x4 - core index']
  #allocation1 [shape = 'u32[144,128]{1,0:T(1,128)}', space=vmem, size = 0x12000, scoped, tag = 'internal scratch']
  %s0 = inlined_call_operand.hbm [shape: f32[2,8,16], index: 0, kind: input, shape index: {}]
  %s1 = inlined_call_operand.hbm [shape: f32[2,16,512], index: 1, kind: input, shape index: {}]
  %s2 = inlined_call_operand.hbm [shape: f32[2,640,128], index: 2, kind: input, shape index: {}]
  %s3 = inlined_call_operand.hbm [shape: f32[2,8,128], index: 3, kind: output, shape index: {}]
  %s4 = sld [smem:[#allocation0]]
  $region57: #{tpu_custom_call.1} parent=0
    _
  %s6 = ssub.s32 1, %s4
  %s7 = scalar_select 0, %s6, %s4
  $region1: #{tpu_custom_call.1} parent=0
    #allocation2 [shape = 'u8[8192]{0}', space=vmem, size = 0x2000, scoped, tag = 'input window, operand 0']
    #allocation3 [shape = 's32[2]{0}', space=sflag, size = 0x8, scoped, tag = 'scoped memory for tpu_custom_call.1']
    #allocation4 [shape = 's32[2]{0}', space=sflag, size = 0x8, scoped, tag = 'scoped memory for tpu_custom_call.1']
    #allocation5 [shape = 'u8[65536]{0}', space=vmem, size = 0x10000, scoped, tag = 'input window, operand 1']
    #allocation6 [shape = 's32[2]{0}', space=sflag, size = 0x8, scoped, tag = 'scoped memory for tpu_custom_call.1']
    #allocation7 [shape = 'u8[655360]{0}', space=vmem, size = 0xa0000, scoped, tag = 'input window, operand 2']
    #allocation8 [shape = 'u8[8192]{0}', space=vmem, size = 0x2000, scoped, tag = 'output window, operand 0']
    %8 = vsyncpa [#allocation3], 0
    %s9 = scalar_lea.sflag [#allocation3], 1
    %10 = vsyncpa %s9, 0
    %11 = vsyncpa [#allocation6], 0
    %s12 = scalar_lea.sflag [#allocation6], 1
    %13 = vsyncpa %s12, 0
    %14 = vsyncpa [#allocation4], 0
    %s15 = scalar_lea.sflag [#allocation4], 1
    %16 = vsyncpa %s15, 0
    loop: start=0, step=1, limit=4
    $region2: #{tpu_custom_call.1} parent=1 // loop_pre_header
      _
    $region3: #{tpu_custom_call.1} parent=1 // loop_header
      %s18 = sphi 0, %s22
      %p19 = scmp.ge.s32.totalorder %s18, 4
      %s25 = sphi 0, %s37
      %s26 = sphi 0, %s33
      %s27 = sphi 0, %s25
      %s28 = sphi 0, %s26
      %s29 = sphi 0, %s27
      %s30 = sphi 0, %s28
      %s42 = sphi 0, %s44
      %s45 = sphi 0, %s42
      %s46 = sphi 0, %s45
      %s62 = sphi 0, %s46
      %s68 = sphi 0, %s70
      %s71 = sphi 0, %s68
      %s72 = sphi 0, %s71
      %s88 = sphi 0, %s72
      %s94 = sphi 0, %s96
      %s97 = sphi 0, %s94
      %s98 = sphi 0, %s97
      %s114 = sphi 0, %s98
      %s122 = sphi 0, %s124
      %s125 = sphi 0, %s122
      %s126 = sphi 0, %s125
      %s142 = sphi 0, %s126
    $region4: #{tpu_custom_call.1} parent=1 // loop_header_branch
      %21 = sbr.rel (%p19) target = $region8
    $region5: #{tpu_custom_call.1} parent=1 // loop_body
      %s23 = ssub.s32 %s18, 1
      %s24 = ssub.s32 %s18, 2
      %s31 = sadd.s32 1, %s26
      %p32 = scmp.ge.s32.totalorder %s31, 1
      %s33 = scalar_select %p32, 0, %s31
      %s34 = sadd.s32 1, %s25
      %s35 = scalar_select %p32, %s34, %s25
      %p36 = scmp.ge.s32.totalorder %s35, 2
      %s37 = scalar_select %p36, 0, %s35
      %s38 = ssub.s32 %s25, %s37
      %s39 = ssub.s32 %s26, %s33
      %s40 = sor.u32 %s38, %s39
      %p41 = scmp.eq.s32.totalorder %s40, 0
      %s43 = sadd.s32 %s42, 1
      %s44 = scalar_select %p41, %s42, %s43
      %p47 = pneg %p41
      %p48 = scmp.eq.s32.totalorder %s18, 1
      %p49 = por %p47, %p48
      %p50 = scmp.ne.s32.totalorder %s42, %s45
      %p51 = scmp.eq.s32.totalorder %s18, 0
      %p52 = por %p50, %p51
      %p53 = scmp.ne.s32.totalorder %s42, %s45
      %p54 = scmp.eq.s32.totalorder %s23, 1
      %p55 = por %p53, %p54
      %p56 = scmp.ne.s32.totalorder %s45, %s46
      %p57 = scmp.eq.s32.totalorder %s23, 0
      %p58 = por %p56, %p57
      %p59 = scmp.ne.s32.totalorder %s45, %s46
      %p60 = scmp.eq.s32.totalorder %s24, 1
      %p61 = por %p59, %p60
      %p63 = scmp.ne.s32.totalorder %s46, %s62
      %p64 = scmp.eq.s32.totalorder %s24, 0
      %p65 = por %p63, %p64
      %s66 = ssub.s32 %s25, %s37
      %p67 = scmp.eq.s32.totalorder %s66, 0
      %s69 = sadd.s32 %s68, 1
      %s70 = scalar_select %p67, %s68, %s69
      %p73 = pneg %p67
      %p74 = scmp.eq.s32.totalorder %s18, 1
      %p75 = por %p73, %p74
      %p76 = scmp.ne.s32.totalorder %s68, %s71
      %p77 = scmp.eq.s32.totalorder %s18, 0
      %p78 = por %p76, %p77
      %p79 = scmp.ne.s32.totalorder %s68, %s71
      %p80 = scmp.eq.s32.totalorder %s23, 1
      %p81 = por %p79, %p80
      %p82 = scmp.ne.s32.totalorder %s71, %s72
      %p83 = scmp.eq.s32.totalorder %s23, 0
      %p84 = por %p82, %p83
      %p85 = scmp.ne.s32.totalorder %s71, %s72
      %p86 = scmp.eq.s32.totalorder %s24, 1
      %p87 = por %p85, %p86
      %p89 = scmp.ne.s32.totalorder %s72, %s88
      %p90 = scmp.eq.s32.totalorder %s24, 0
      %p91 = por %p89, %p90
      %s92 = ssub.s32 %s25, %s37
      %p93 = scmp.eq.s32.totalorder %s92, 0
      %s95 = sadd.s32 %s94, 1
      %s96 = scalar_select %p93, %s94, %s95
      %p99 = pneg %p93
      %p100 = scmp.eq.s32.totalorder %s18, 1
      %p101 = por %p99, %p100
      %p102 = scmp.ne.s32.totalorder %s94, %s97
      %p103 = scmp.eq.s32.totalorder %s18, 0
      %p104 = por %p102, %p103
      %p105 = scmp.ne.s32.totalorder %s94, %s97
      %p106 = scmp.eq.s32.totalorder %s23, 1
      %p107 = por %p105, %p106
      %p108 = scmp.ne.s32.totalorder %s97, %s98
      %p109 = scmp.eq.s32.totalorder %s23, 0
      %p110 = por %p108, %p109
      %p111 = scmp.ne.s32.totalorder %s97, %s98
      %p112 = scmp.eq.s32.totalorder %s24, 1
      %p113 = por %p111, %p112
      %p115 = scmp.ne.s32.totalorder %s98, %s114
      %p116 = scmp.eq.s32.totalorder %s24, 0
      %p117 = por %p115, %p116
      %s118 = ssub.s32 %s25, %s37
      %s119 = ssub.s32 %s26, %s33
      %s120 = sor.u32 %s118, %s119
      %p121 = scmp.eq.s32.totalorder %s120, 0
      %s123 = sadd.s32 %s122, 1
      %s124 = scalar_select %p121, %s122, %s123
      %p127 = pneg %p121
      %p128 = scmp.eq.s32.totalorder %s18, 1
      %p129 = por %p127, %p128
      %p130 = scmp.ne.s32.totalorder %s122, %s125
      %p131 = scmp.eq.s32.totalorder %s18, 0
      %p132 = por %p130, %p131
      %p133 = scmp.ne.s32.totalorder %s122, %s125
      %p134 = scmp.eq.s32.totalorder %s23, 1
      %p135 = por %p133, %p134
      %p136 = scmp.ne.s32.totalorder %s125, %s126
      %p137 = scmp.eq.s32.totalorder %s23, 0
      %p138 = por %p136, %p137
      %p139 = scmp.ne.s32.totalorder %s125, %s126
      %p140 = scmp.eq.s32.totalorder %s24, 1
      %p141 = por %p139, %p140
      %p143 = scmp.ne.s32.totalorder %s126, %s142
      %p144 = scmp.eq.s32.totalorder %s24, 0
      %p145 = por %p143, %p144
      %p146 = scmp.le.s32.totalorder 1, %s18
      %p147 = scmp.lt.s32.totalorder %s18, 3
      %p148 = pnand %p146, %p147
      %p149 = pneg %p148
      // Predicated region
      $region9: #{tpu_custom_call.1} parent=5 // pred_check
        _
      $region10: #{tpu_custom_call.1} parent=5 // pred_check_branch
        %151 = sbr.rel (%p148) target = $region12
      $region11: #{tpu_custom_call.1} parent=5 // pred_region
        %s152 = ssub.s32 %s18, 1
      $region12: #{tpu_custom_call.1} parent=5 // pred_fallthru
        _
      %p153 = scmp.lt.s32.totalorder %s18, 2
      // Predicated region
      $region13: #{tpu_custom_call.1} parent=5 // pred_check
        %p154 = pneg %p153
      $region14: #{tpu_custom_call.1} parent=5 // pred_check_branch
        %156 = sbr.rel (%p154) target = $region16
      $region15: #{tpu_custom_call.1} parent=5 // pred_region
        // Predicated region
        $region17: #{tpu_custom_call.1} parent=15 // pred_check
          %p157 = pneg %p52
        $region18: #{tpu_custom_call.1} parent=15 // pred_check_branch
          %159 = sbr.rel (%p157) target = $region20
        $region19: #{tpu_custom_call.1} parent=15 // pred_region
          %s160 = sand.u32 %s42, 1
          %s161 = scalar_lea.sflag [#allocation3], %s160
          %s162 = sand.u32 %s42, 1
          %s163 = smul.addr %s162, 8
          %s164 = scalar_lea.vmem [#allocation2], %s163
          %s166 = ssub.s32 128, 128
          %167 = vsyncadd %s161, %s166
          %s168 = sadd.s32 %s26, %s25
          %s169 = smul.addr %s168, 128
          %s170 = scalar_lea.hbm %s0, %s169
          %s172 = sshll.u32 %s164, 4
          %s173 = int_to_ptr.vmem [resolvable:$true] %s172
          %175 = dma.hbm_to_vmem [thread:$0]  %s170, 128, %s173, %s161
        $region20: #{tpu_custom_call.1} parent=15 // pred_fallthru
          _
        // Predicated region
        $region21: #{tpu_custom_call.1} parent=15 // pred_check
          %p176 = pneg %p78
        $region22: #{tpu_custom_call.1} parent=15 // pred_check_branch
          %178 = sbr.rel (%p176) target = $region24
        $region23: #{tpu_custom_call.1} parent=15 // pred_region
          %s179 = sand.u32 %s18, 1
          %s180 = scalar_lea.sflag [#allocation6], %s179
          %s181 = sand.u32 %s68, 1
          %s182 = smul.addr %s181, 64
          %s183 = scalar_lea.vmem [#allocation5], %s182
          %s185 = ssub.s32 1024, 1024
          %186 = vsyncadd %s180, %s185
          %s187 = smul.addr %s25, 8
          %s188 = smul.addr %s187, 128
          %s189 = scalar_lea.hbm %s1, %s188
          %s190 = sshll.u32 %s183, 4
          %s191 = int_to_ptr.vmem [resolvable:$true] %s190
          %196 = dma.hbm_to_vmem [thread:$0]  %s189, 1024, %s191, %s180, 512, 512, 32
        $region24: #{tpu_custom_call.1} parent=15 // pred_fallthru
          _
        // Predicated region
        $region25: #{tpu_custom_call.1} parent=15 // pred_check
          %p197 = pneg %p104
        $region26: #{tpu_custom_call.1} parent=15 // pred_check_branch
          %199 = sbr.rel (%p197) target = $region28
        $region27: #{tpu_custom_call.1} parent=15 // pred_region
          %s200 = sand.u32 %s18, 1
          %s201 = scalar_lea.sflag [#allocation6], %s200
          %s202 = sand.u32 %s94, 1
          %s203 = smul.addr %s202, 640
          %s204 = scalar_lea.vmem [#allocation7], %s203
          %s206 = ssub.s32 10240, 10240
          %207 = vsyncadd %s201, %s206
          %s208 = smul.addr %s25, 80
          %s209 = smul.addr %s208, 128
          %s210 = scalar_lea.hbm %s2, %s209
          %s211 = sshll.u32 %s204, 4
          %s212 = int_to_ptr.vmem [resolvable:$true] %s211
          %217 = dma.hbm_to_vmem [thread:$0]  %s210, 10240, %s212, %s201, 128, 128, 8
        $region28: #{tpu_custom_call.1} parent=15 // pred_fallthru
          _
      $region16: #{tpu_custom_call.1} parent=5 // pred_fallthru
        _
      %p218 = scmp.le.s32.totalorder 1, %s18
      %p219 = scmp.lt.s32.totalorder %s18, 3
      %p220 = pnand %p218, %p219
      %p221 = pneg %p220
      // Predicated region
      $region29: #{tpu_custom_call.1} parent=5 // pred_check
        _
      $region30: #{tpu_custom_call.1} parent=5 // pred_check_branch
        %223 = sbr.rel (%p220) target = $region32
      $region31: #{tpu_custom_call.1} parent=5 // pred_region
        %s224 = ssub.s32 %s18, 1
        %s225 = sand.u32 %s45, 1
        %s226 = scalar_lea.sflag [#allocation3], %s225
        %s227 = sand.u32 %s45, 1
        %s228 = smul.addr %s227, 8
        %s229 = scalar_lea.vmem [#allocation2], %s228
        // Predicated region
        $region33: #{tpu_custom_call.1} parent=31 // pred_check
          %p230 = pneg %p58
        $region34: #{tpu_custom_call.1} parent=31 // pred_check_branch
          %232 = sbr.rel (%p230) target = $region36
        $region35: #{tpu_custom_call.1} parent=31 // pred_region
          %233 = dma.done %s226, 128
        $region36: #{tpu_custom_call.1} parent=31 // pred_fallthru
          _
        %s234 = sand.u32 %s23, 1
        %s235 = scalar_lea.sflag [#allocation6], %s234
        %s236 = sand.u32 %s71, 1
        %s237 = smul.addr %s236, 64
        %s238 = scalar_lea.vmem [#allocation5], %s237
        // Predicated region
        $region37: #{tpu_custom_call.1} parent=31 // pred_check
          %p239 = pneg %p84
        $region38: #{tpu_custom_call.1} parent=31 // pred_check_branch
          %241 = sbr.rel (%p239) target = $region40
        $region39: #{tpu_custom_call.1} parent=31 // pred_region
          %242 = dma.done %s235, 1024
        $region40: #{tpu_custom_call.1} parent=31 // pred_fallthru
          _
        %s243 = sand.u32 %s23, 1
        %s244 = scalar_lea.sflag [#allocation6], %s243
        %s245 = sand.u32 %s97, 1
        %s246 = smul.addr %s245, 640
        %s247 = scalar_lea.vmem [#allocation7], %s246
        // Predicated region
        $region41: #{tpu_custom_call.1} parent=31 // pred_check
          %p248 = pneg %p110
        $region42: #{tpu_custom_call.1} parent=31 // pred_check_branch
          %250 = sbr.rel (%p248) target = $region44
        $region43: #{tpu_custom_call.1} parent=31 // pred_region
          %251 = dma.done %s244, 10240
        $region44: #{tpu_custom_call.1} parent=31 // pred_fallthru
          _
        %s252 = sand.u32 %s45, 1
        %s253 = scalar_lea.sflag [#allocation3], %s252
        %s254 = sand.u32 %s45, 1
        %s255 = smul.addr %s254, 8
        %s256 = scalar_lea.vmem [#allocation2], %s255
        %p257 = pneg %p58
        %p258 = pneg %p55
        %s259 = sand.u32 %s23, 1
        %s260 = scalar_lea.sflag [#allocation6], %s259
        %s261 = sand.u32 %s71, 1
        %s262 = smul.addr %s261, 64
        %s263 = scalar_lea.vmem [#allocation5], %s262
        %p264 = pneg %p84
        %p265 = pneg %p81
        %s266 = sand.u32 %s23, 1
        %s267 = scalar_lea.sflag [#allocation6], %s266
        %s268 = sand.u32 %s97, 1
        %s269 = smul.addr %s268, 640
        %s270 = scalar_lea.vmem [#allocation7], %s269
        %p271 = pneg %p110
        %p272 = pneg %p107
        %p273 = pneg %p138
        %p274 = pneg %p135
        %s275 = sand.u32 %s125, 1
        %s276 = scalar_lea.sflag [#allocation4], %s275
        %s277 = sand.u32 %s125, 1
        %s278 = smul.addr %s277, 8
        %s279 = scalar_lea.vmem [#allocation8], %s278
        %v280 = vld [vmem:[%s229] sm:$0xff]
        %v281 = vld [vmem:[%s238] sm:$0xff]
        %v282 = vld [vmem:[%s238 + $0x8] sm:$0xff]
        %v283 = vld [vmem:[%s238 + $0x10] sm:$0xff]
        %v284 = vld [vmem:[%s238 + $0x18] sm:$0xff]
        %v285 = vld [vmem:[%s238 + $0x20] sm:$0xff]
        %v286 = vld [vmem:[%s238 + $0x28] sm:$0xff]
        %v287 = vld [vmem:[%s238 + $0x30] sm:$0xff]
        %v288 = vld [vmem:[%s238 + $0x38] sm:$0xff]
        %vm289 = vcmask 130048
        %v291 = vsel %vm289, %v280, 0
        %293 = vmatprep.subr.mxu0 0.0
        %294 = vmatpush1.msra.mxu0 0.0
        %295 = vmatprep.subr.mxu0 0.0
        %296 = vmatpush1.msra.mxu0 0.0
        %297 = vmatprep.subr.mxu0 0.0
        %298 = vmatpush1.msra.mxu0 0.0
        %299 = vmatprep.subr.mxu0 0.0
        %300 = vmatpush1.msra.mxu0 0.0
        %301 = vmatprep.subr.mxu0 0.0
        %302 = vmatpush1.msra.mxu0 0.0
        %303 = vmatprep.subr.mxu0 0.0
        %304 = vmatpush1.msra.mxu0 0.0
        %305 = vmatprep.subr.mxu0 0.0
        %306 = vmatpush1.msra.mxu0 0.0
        %307 = vmatprep.subr.mxu0 0.0
        %308 = vmatpush1.msra.mxu0 0.0
        %309 = vmatprep.subr.mxu0 0.0
        %310 = vmatpush1.msra.mxu0 0.0
        %311 = vmatprep.subr.mxu0 0.0
        %312 = vmatpush1.msra.mxu0 0.0
        %313 = vmatprep.subr.mxu0 0.0
        %314 = vmatpush1.msra.mxu0 0.0
        %315 = vmatprep.subr.mxu0 0.0
        %316 = vmatpush1.msra.mxu0 0.0
        %317 = vmatprep.subr.mxu0 0.0
        %318 = vmatpush1.msra.mxu0 0.0
        %319 = vmatprep.subr.mxu0 0.0
        %320 = vmatpush1.msra.mxu0 0.0
        %321 = vmatprep.subr.mxu0 %v286
        %322 = vmatpush1.msra.mxu0 %v285
        %323 = vmatprep.subr.mxu0 %v282
        %324 = vmatpush1.msra.mxu0 %v281
        %325 = vmatprep.subr.mxu0 0.0
        %326 = vmatpush2.msra.mxu0 0.0
        %327 = vmatprep.subr.mxu0 0.0
        %328 = vmatpush2.msra.mxu0 0.0
        %329 = vmatprep.subr.mxu0 0.0
        %330 = vmatpush2.msra.mxu0 0.0
        %331 = vmatprep.subr.mxu0 0.0
        %332 = vmatpush2.msra.mxu0 0.0
        %333 = vmatprep.subr.mxu0 0.0
        %334 = vmatpush2.msra.mxu0 0.0
        %335 = vmatprep.subr.mxu0 0.0
        %336 = vmatpush2.msra.mxu0 0.0
        %337 = vmatprep.subr.mxu0 0.0
        %338 = vmatpush2.msra.mxu0 0.0
        %339 = vmatprep.subr.mxu0 0.0
        %340 = vmatpush2.msra.mxu0 0.0
        %341 = vmatprep.subr.mxu0 0.0
        %342 = vmatpush2.msra.mxu0 0.0
        %343 = vmatprep.subr.mxu0 0.0
        %344 = vmatpush2.msra.mxu0 0.0
        %345 = vmatprep.subr.mxu0 0.0
        %346 = vmatpush2.msra.mxu0 0.0
        %347 = vmatprep.subr.mxu0 0.0
        %348 = vmatpush2.msra.mxu0 0.0
        %349 = vmatprep.subr.mxu0 0.0
        %350 = vmatpush2.msra.mxu0 0.0
        %351 = vmatprep.subr.mxu0 0.0
        %352 = vmatpush2.msra.mxu0 0.0
        %353 = vmatprep.subr.mxu0 0.0
        %354 = vmatpush2.msra.mxu0 0.0
        %355 = vmatprep.subr.mxu0 0.0
        %356 = vmatpush2.msra.mxu0 0.0
        %357 = vmatprep.mubr.f32.mxu0 0.0
        %358 = vmatmul.mubr.f32.gmra.mxu0 %v291
        %v359 = vpop.f32.mrf.mxu0
        %v360 = vadd.f32 0.0, %v359
        %v361 = vpop.f32.mrf.mxu0
        %v362 = vadd.f32 0.0, %v361
        %363 = vdwg.mxu0
        %364 = vmatprep.subr.mxu0 0.0
        %365 = vmatpush1.msra.mxu0 0.0
        %366 = vmatprep.subr.mxu0 0.0
        %367 = vmatpush1.msra.mxu0 0.0
        %368 = vmatprep.subr.mxu0 0.0
        %369 = vmatpush1.msra.mxu0 0.0
        %370 = vmatprep.subr.mxu0 0.0
        %371 = vmatpush1.msra.mxu0 0.0
        %372 = vmatprep.subr.mxu0 0.0
        %373 = vmatpush1.msra.mxu0 0.0
        %374 = vmatprep.subr.mxu0 0.0
        %375 = vmatpush1.msra.mxu0 0.0
        %376 = vmatprep.subr.mxu0 0.0
        %377 = vmatpush1.msra.mxu0 0.0
        %378 = vmatprep.subr.mxu0 0.0
        %379 = vmatpush1.msra.mxu0 0.0
        %380 = vmatprep.subr.mxu0 0.0
        %381 = vmatpush1.msra.mxu0 0.0
        %382 = vmatprep.subr.mxu0 0.0
        %383 = vmatpush1.msra.mxu0 0.0
        %384 = vmatprep.subr.mxu0 0.0
        %385 = vmatpush1.msra.mxu0 0.0
        %386 = vmatprep.subr.mxu0 0.0
        %387 = vmatpush1.msra.mxu0 0.0
        %388 = vmatprep.subr.mxu0 0.0
        %389 = vmatpush1.msra.mxu0 0.0
        %390 = vmatprep.subr.mxu0 0.0
        %391 = vmatpush1.msra.mxu0 0.0
        %392 = vmatprep.subr.mxu0 %v288
        %393 = vmatpush1.msra.mxu0 %v287
        %394 = vmatprep.subr.mxu0 %v284
        %395 = vmatpush1.msra.mxu0 %v283
        %396 = vmatprep.subr.mxu0 0.0
        %397 = vmatpush2.msra.mxu0 0.0
        %398 = vmatprep.subr.mxu0 0.0
        %399 = vmatpush2.msra.mxu0 0.0
        %400 = vmatprep.subr.mxu0 0.0
        %401 = vmatpush2.msra.mxu0 0.0
        %402 = vmatprep.subr.mxu0 0.0
        %403 = vmatpush2.msra.mxu0 0.0
        %404 = vmatprep.subr.mxu0 0.0
        %405 = vmatpush2.msra.mxu0 0.0
        %406 = vmatprep.subr.mxu0 0.0
        %407 = vmatpush2.msra.mxu0 0.0
        %408 = vmatprep.subr.mxu0 0.0
        %409 = vmatpush2.msra.mxu0 0.0
        %410 = vmatprep.subr.mxu0 0.0
        %411 = vmatpush2.msra.mxu0 0.0
        %412 = vmatprep.subr.mxu0 0.0
        %413 = vmatpush2.msra.mxu0 0.0
        %414 = vmatprep.subr.mxu0 0.0
        %415 = vmatpush2.msra.mxu0 0.0
        %416 = vmatprep.subr.mxu0 0.0
        %417 = vmatpush2.msra.mxu0 0.0
        %418 = vmatprep.subr.mxu0 0.0
        %419 = vmatpush2.msra.mxu0 0.0
        %420 = vmatprep.subr.mxu0 0.0
        %421 = vmatpush2.msra.mxu0 0.0
        %422 = vmatprep.subr.mxu0 0.0
        %423 = vmatpush2.msra.mxu0 0.0
        %424 = vmatprep.subr.mxu0 0.0
        %425 = vmatpush2.msra.mxu0 0.0
        %426 = vmatprep.subr.mxu0 0.0
        %427 = vmatpush2.msra.mxu0 0.0
        %428 = vmatprep.mubr.f32.mxu0 0.0
        %429 = vmatmul.mubr.f32.gmra.mxu0 %v291
        %v430 = vpop.f32.mrf.mxu0
        %v431 = vadd.f32 0.0, %v430
        %v432 = vpop.f32.mrf.mxu0
        %v433 = vadd.f32 0.0, %v432
        %434 = vdwg.mxu0
        %v435 = vmax.f32 %v360, 0.0
        %v436 = vld [vmem:[%s247] sm:$0xff]
        %v437 = vld [vmem:[%s247 + $0x8] sm:$0xff]
        %v438 = vld [vmem:[%s247 + $0x10] sm:$0xff]
        %v439 = vld [vmem:[%s247 + $0x18] sm:$0xff]
        %v440 = vld [vmem:[%s247 + $0x20] sm:$0xff]
        %v441 = vld [vmem:[%s247 + $0x28] sm:$0xff]
        %v442 = vld [vmem:[%s247 + $0x30] sm:$0xff]
        %v443 = vld [vmem:[%s247 + $0x38] sm:$0xff]
        %v444 = vld [vmem:[%s247 + $0x40] sm:$0xff]
        %v445 = vld [vmem:[%s247 + $0x48] sm:$0xff]
        %v446 = vld [vmem:[%s247 + $0x50] sm:$0xff]
        %v447 = vld [vmem:[%s247 + $0x58] sm:$0xff]
        %v448 = vld [vmem:[%s247 + $0x60] sm:$0xff]
        %v449 = vld [vmem:[%s247 + $0x68] sm:$0xff]
        %v450 = vld [vmem:[%s247 + $0x70] sm:$0xff]
        %v451 = vld [vmem:[%s247 + $0x78] sm:$0xff]
        %452 = vmatprep.subr.mxu0 0.0
        %453 = vmatpush1.msra.mxu0 %v451
        %454 = vmatprep.subr.mxu0 0.0
        %455 = vmatpush1.msra.mxu0 %v450
        %456 = vmatprep.subr.mxu0 0.0
        %457 = vmatpush1.msra.mxu0 %v449
        %458 = vmatprep.subr.mxu0 0.0
        %459 = vmatpush1.msra.mxu0 %v448
        %460 = vmatprep.subr.mxu0 0.0
        %461 = vmatpush1.msra.mxu0 %v447
        %462 = vmatprep.subr.mxu0 0.0
        %463 = vmatpush1.msra.mxu0 %v446
        %464 = vmatprep.subr.mxu0 0.0
        %465 = vmatpush1.msra.mxu0 %v445
        %466 = vmatprep.subr.mxu0 0.0
        %467 = vmatpush1.msra.mxu0 %v444
        %468 = vmatprep.subr.mxu0 0.0
        %469 = vmatpush1.msra.mxu0 %v443
        %470 = vmatprep.subr.mxu0 0.0
        %471 = vmatpush1.msra.mxu0 %v442
        %472 = vmatprep.subr.mxu0 0.0
        %473 = vmatpush1.msra.mxu0 %v441
        %474 = vmatprep.subr.mxu0 0.0
        %475 = vmatpush1.msra.mxu0 %v440
        %476 = vmatprep.subr.mxu0 0.0
        %477 = vmatpush1.msra.mxu0 %v439
        %478 = vmatprep.subr.mxu0 0.0
        %479 = vmatpush1.msra.mxu0 %v438
        %480 = vmatprep.subr.mxu0 0.0
        %481 = vmatpush1.msra.mxu0 %v437
        %482 = vmatprep.subr.mxu0 0.0
        %483 = vmatpush1.msra.mxu0 %v436
        %484 = vmatprep.subr.mxu0 0.0
        %485 = vmatpush2.msra.mxu0 0.0
        %486 = vmatprep.subr.mxu0 0.0
        %487 = vmatpush2.msra.mxu0 0.0
        %488 = vmatprep.subr.mxu0 0.0
        %489 = vmatpush2.msra.mxu0 0.0
        %490 = vmatprep.subr.mxu0 0.0
        %491 = vmatpush2.msra.mxu0 0.0
        %492 = vmatprep.subr.mxu0 0.0
        %493 = vmatpush2.msra.mxu0 0.0
        %494 = vmatprep.subr.mxu0 0.0
        %495 = vmatpush2.msra.mxu0 0.0
        %496 = vmatprep.subr.mxu0 0.0
        %497 = vmatpush2.msra.mxu0 0.0
        %498 = vmatprep.subr.mxu0 0.0
        %499 = vmatpush2.msra.mxu0 0.0
        %500 = vmatprep.subr.mxu0 0.0
        %501 = vmatpush2.msra.mxu0 0.0
        %502 = vmatprep.subr.mxu0 0.0
        %503 = vmatpush2.msra.mxu0 0.0
        %504 = vmatprep.subr.mxu0 0.0
        %505 = vmatpush2.msra.mxu0 0.0
        %506 = vmatprep.subr.mxu0 0.0
        %507 = vmatpush2.msra.mxu0 0.0
        %508 = vmatprep.subr.mxu0 0.0
        %509 = vmatpush2.msra.mxu0 0.0
        %510 = vmatprep.subr.mxu0 0.0
        %511 = vmatpush2.msra.mxu0 0.0
        %512 = vmatprep.subr.mxu0 0.0
        %513 = vmatpush2.msra.mxu0 0.0
        %514 = vmatprep.subr.mxu0 0.0
        %515 = vmatpush2.msra.mxu0 0.0
        %516 = vmatprep.mubr.f32.mxu0 0.0
        %517 = vmatmul.mubr.f32.gmra.mxu0 %v435
        %v518 = vpop.f32.mrf.mxu0
        %v519 = vadd.f32 0.0, %v518
        %v520 = vpop.f32.mrf.mxu0
        %521 = vdwg.mxu0
        %522 = vmax.xlane.f32.xlu0 %v362
        %v523 = vpop.xlane.xlu0 %522
        %v524 = vsub.f32 %v362, %v523
        %v525 = vmul.f32 %v524, 1.442695
        %v526 = vpow.pop %v525
        %527 = vadd.xlane.f32.xlu0 %v526
        %v528 = vpop.xlane.xlu0 %527
        %v529 = vrcp.pop %v528
        %v530 = vmul.f32 %v526, %v529
        %v531 = vld [vmem:[%s247 + $0x80] sm:$0xff]
        %v532 = vld [vmem:[%s247 + $0x88] sm:$0xff]
        %v533 = vld [vmem:[%s247 + $0x90] sm:$0xff]
        %v534 = vld [vmem:[%s247 + $0x98] sm:$0xff]
        %v535 = vld [vmem:[%s247 + $0xa0] sm:$0xff]
        %v536 = vld [vmem:[%s247 + $0xa8] sm:$0xff]
        %v537 = vld [vmem:[%s247 + $0xb0] sm:$0xff]
        %v538 = vld [vmem:[%s247 + $0xb8] sm:$0xff]
        %v539 = vld [vmem:[%s247 + $0xc0] sm:$0xff]
        %v540 = vld [vmem:[%s247 + $0xc8] sm:$0xff]
        %v541 = vld [vmem:[%s247 + $0xd0] sm:$0xff]
        %v542 = vld [vmem:[%s247 + $0xd8] sm:$0xff]
        %v543 = vld [vmem:[%s247 + $0xe0] sm:$0xff]
        %v544 = vld [vmem:[%s247 + $0xe8] sm:$0xff]
        %v545 = vld [vmem:[%s247 + $0xf0] sm:$0xff]
        %v546 = vld [vmem:[%s247 + $0xf8] sm:$0xff]
        %547 = vmax.xlane.f32.xlu0 %v431
        %v548 = vpop.xlane.xlu0 %547
        %v549 = vsub.f32 %v431, %v548
        %v550 = vmul.f32 %v549, 1.442695
        %v551 = vpow.pop %v550
        %552 = vadd.xlane.f32.xlu0 %v551
        %v553 = vpop.xlane.xlu0 %552
        %v554 = vrcp.pop %v553
        %v555 = vmul.f32 %v551, %v554
        %v556 = vld [vmem:[%s247 + $0x100] sm:$0xff]
        %v557 = vld [vmem:[%s247 + $0x108] sm:$0xff]
        %v558 = vld [vmem:[%s247 + $0x110] sm:$0xff]
        %v559 = vld [vmem:[%s247 + $0x118] sm:$0xff]
        %v560 = vld [vmem:[%s247 + $0x120] sm:$0xff]
        %v561 = vld [vmem:[%s247 + $0x128] sm:$0xff]
        %v562 = vld [vmem:[%s247 + $0x130] sm:$0xff]
        %v563 = vld [vmem:[%s247 + $0x138] sm:$0xff]
        %v564 = vld [vmem:[%s247 + $0x140] sm:$0xff]
        %v565 = vld [vmem:[%s247 + $0x148] sm:$0xff]
        %v566 = vld [vmem:[%s247 + $0x150] sm:$0xff]
        %v567 = vld [vmem:[%s247 + $0x158] sm:$0xff]
        %v568 = vld [vmem:[%s247 + $0x160] sm:$0xff]
        %v569 = vld [vmem:[%s247 + $0x168] sm:$0xff]
        %v570 = vld [vmem:[%s247 + $0x170] sm:$0xff]
        %v571 = vld [vmem:[%s247 + $0x178] sm:$0xff]
        %572 = vmatprep.subr.mxu0 0.0
        %573 = vmatpush1.msra.mxu0 %v571
        %574 = vmatprep.subr.mxu0 0.0
        %575 = vmatpush1.msra.mxu0 %v570
        %576 = vmatprep.subr.mxu0 0.0
        %577 = vmatpush1.msra.mxu0 %v569
        %578 = vmatprep.subr.mxu0 0.0
        %579 = vmatpush1.msra.mxu0 %v568
        %580 = vmatprep.subr.mxu0 0.0
        %581 = vmatpush1.msra.mxu0 %v567
        %582 = vmatprep.subr.mxu0 0.0
        %583 = vmatpush1.msra.mxu0 %v566
        %584 = vmatprep.subr.mxu0 0.0
        %585 = vmatpush1.msra.mxu0 %v565
        %586 = vmatprep.subr.mxu0 0.0
        %587 = vmatpush1.msra.mxu0 %v564
        %588 = vmatprep.subr.mxu0 0.0
        %589 = vmatpush1.msra.mxu0 %v563
        %590 = vmatprep.subr.mxu0 0.0
        %591 = vmatpush1.msra.mxu0 %v562
        %592 = vmatprep.subr.mxu0 0.0
        %593 = vmatpush1.msra.mxu0 %v561
        %594 = vmatprep.subr.mxu0 0.0
        %595 = vmatpush1.msra.mxu0 %v560
        %596 = vmatprep.subr.mxu0 0.0
        %597 = vmatpush1.msra.mxu0 %v559
        %598 = vmatprep.subr.mxu0 0.0
        %599 = vmatpush1.msra.mxu0 %v558
        %600 = vmatprep.subr.mxu0 0.0
        %601 = vmatpush1.msra.mxu0 %v557
        %602 = vmatprep.subr.mxu0 0.0
        %603 = vmatpush1.msra.mxu0 %v556
        %604 = vmatprep.subr.mxu0 0.0
        %605 = vmatpush2.msra.mxu0 0.0
        %606 = vmatprep.subr.mxu0 0.0
        %607 = vmatpush2.msra.mxu0 0.0
        %608 = vmatprep.subr.mxu0 0.0
        %609 = vmatpush2.msra.mxu0 0.0
        %610 = vmatprep.subr.mxu0 0.0
        %611 = vmatpush2.msra.mxu0 0.0
        %612 = vmatprep.subr.mxu0 0.0
        %613 = vmatpush2.msra.mxu0 0.0
        %614 = vmatprep.subr.mxu0 0.0
        %615 = vmatpush2.msra.mxu0 0.0
        %616 = vmatprep.subr.mxu0 0.0
        %617 = vmatpush2.msra.mxu0 0.0
        %618 = vmatprep.subr.mxu0 0.0
        %619 = vmatpush2.msra.mxu0 0.0
        %620 = vmatprep.subr.mxu0 0.0
        %621 = vmatpush2.msra.mxu0 0.0
        %622 = vmatprep.subr.mxu0 0.0
        %623 = vmatpush2.msra.mxu0 0.0
        %624 = vmatprep.subr.mxu0 0.0
        %625 = vmatpush2.msra.mxu0 0.0
        %626 = vmatprep.subr.mxu0 0.0
        %627 = vmatpush2.msra.mxu0 0.0
        %628 = vmatprep.subr.mxu0 0.0
        %629 = vmatpush2.msra.mxu0 0.0
        %630 = vmatprep.subr.mxu0 0.0
        %631 = vmatpush2.msra.mxu0 0.0
        %632 = vmatprep.subr.mxu0 0.0
        %633 = vmatpush2.msra.mxu0 0.0
        %634 = vmatprep.subr.mxu0 0.0
        %635 = vmatpush2.msra.mxu0 0.0
        %636 = vmatprep.mubr.f32.mxu0 0.0
        %637 = vmatmul.mubr.f32.gmra.mxu0 %v555
        %v638 = vpop.f32.mrf.mxu0
        %v639 = vadd.f32 0.0, %v638
        %v640 = vpop.f32.mrf.mxu0
        %641 = vdwg.mxu0
        %642 = vmatprep.subr.mxu0 0.0
        %643 = vmatpush1.msra.mxu0 %v546
        %644 = vmatprep.subr.mxu0 0.0
        %645 = vmatpush1.msra.mxu0 %v545
        %646 = vmatprep.subr.mxu0 0.0
        %647 = vmatpush1.msra.mxu0 %v544
        %648 = vmatprep.subr.mxu0 0.0
        %649 = vmatpush1.msra.mxu0 %v543
        %650 = vmatprep.subr.mxu0 0.0
        %651 = vmatpush1.msra.mxu0 %v542
        %652 = vmatprep.subr.mxu0 0.0
        %653 = vmatpush1.msra.mxu0 %v541
        %654 = vmatprep.subr.mxu0 0.0
        %655 = vmatpush1.msra.mxu0 %v540
        %656 = vmatprep.subr.mxu0 0.0
        %657 = vmatpush1.msra.mxu0 %v539
        %658 = vmatprep.subr.mxu0 0.0
        %659 = vmatpush1.msra.mxu0 %v538
        %660 = vmatprep.subr.mxu0 0.0
        %661 = vmatpush1.msra.mxu0 %v537
        %662 = vmatprep.subr.mxu0 0.0
        %663 = vmatpush1.msra.mxu0 %v536
        %664 = vmatprep.subr.mxu0 0.0
        %665 = vmatpush1.msra.mxu0 %v535
        %666 = vmatprep.subr.mxu0 0.0
        %667 = vmatpush1.msra.mxu0 %v534
        %668 = vmatprep.subr.mxu0 0.0
        %669 = vmatpush1.msra.mxu0 %v533
        %670 = vmatprep.subr.mxu0 0.0
        %671 = vmatpush1.msra.mxu0 %v532
        %672 = vmatprep.subr.mxu0 0.0
        %673 = vmatpush1.msra.mxu0 %v531
        %674 = vmatprep.subr.mxu0 0.0
        %675 = vmatpush2.msra.mxu0 0.0
        %676 = vmatprep.subr.mxu0 0.0
        %677 = vmatpush2.msra.mxu0 0.0
        %678 = vmatprep.subr.mxu0 0.0
        %679 = vmatpush2.msra.mxu0 0.0
        %680 = vmatprep.subr.mxu0 0.0
        %681 = vmatpush2.msra.mxu0 0.0
        %682 = vmatprep.subr.mxu0 0.0
        %683 = vmatpush2.msra.mxu0 0.0
        %684 = vmatprep.subr.mxu0 0.0
        %685 = vmatpush2.msra.mxu0 0.0
        %686 = vmatprep.subr.mxu0 0.0
        %687 = vmatpush2.msra.mxu0 0.0
        %688 = vmatprep.subr.mxu0 0.0
        %689 = vmatpush2.msra.mxu0 0.0
        %690 = vmatprep.subr.mxu0 0.0
        %691 = vmatpush2.msra.mxu0 0.0
        %692 = vmatprep.subr.mxu0 0.0
        %693 = vmatpush2.msra.mxu0 0.0
        %694 = vmatprep.subr.mxu0 0.0
        %695 = vmatpush2.msra.mxu0 0.0
        %696 = vmatprep.subr.mxu0 0.0
        %697 = vmatpush2.msra.mxu0 0.0
        %698 = vmatprep.subr.mxu0 0.0
        %699 = vmatpush2.msra.mxu0 0.0
        %700 = vmatprep.subr.mxu0 0.0
        %701 = vmatpush2.msra.mxu0 0.0
        %702 = vmatprep.subr.mxu0 0.0
        %703 = vmatpush2.msra.mxu0 0.0
        %704 = vmatprep.subr.mxu0 0.0
        %705 = vmatpush2.msra.mxu0 0.0
        %706 = vmatprep.mubr.f32.mxu0 0.0
        %707 = vmatmul.mubr.f32.gmra.mxu0 %v530
        %v708 = vpop.f32.mrf.mxu0
        %v709 = vadd.f32 %v639, %v708
        %v710 = vpop.f32.mrf.mxu0
        %711 = vdwg.mxu0
        %712 = vmax.xlane.f32.xlu0 %v433
        %v713 = vpop.xlane.xlu0 %712
        %v714 = vsub.f32 %v433, %v713
        %v715 = vmul.f32 %v714, 1.442695
        %v716 = vpow.pop %v715
        %717 = vadd.xlane.f32.xlu0 %v716
        %v718 = vpop.xlane.xlu0 %717
        %v719 = vrcp.pop %v718
        %v720 = vmul.f32 %v716, %v719
        %v721 = vld [vmem:[%s247 + $0x180] sm:$0xff]
        %v722 = vld [vmem:[%s247 + $0x188] sm:$0xff]
        %v723 = vld [vmem:[%s247 + $0x190] sm:$0xff]
        %v724 = vld [vmem:[%s247 + $0x198] sm:$0xff]
        %v725 = vld [vmem:[%s247 + $0x1a0] sm:$0xff]
        %v726 = vld [vmem:[%s247 + $0x1a8] sm:$0xff]
        %v727 = vld [vmem:[%s247 + $0x1b0] sm:$0xff]
        %v728 = vld [vmem:[%s247 + $0x1b8] sm:$0xff]
        %v729 = vld [vmem:[%s247 + $0x1c0] sm:$0xff]
        %v730 = vld [vmem:[%s247 + $0x1c8] sm:$0xff]
        %v731 = vld [vmem:[%s247 + $0x1d0] sm:$0xff]
        %v732 = vld [vmem:[%s247 + $0x1d8] sm:$0xff]
        %v733 = vld [vmem:[%s247 + $0x1e0] sm:$0xff]
        %v734 = vld [vmem:[%s247 + $0x1e8] sm:$0xff]
        %v735 = vld [vmem:[%s247 + $0x1f0] sm:$0xff]
        %v736 = vld [vmem:[%s247 + $0x1f8] sm:$0xff]
        %737 = vmatprep.subr.mxu0 0.0
        %738 = vmatpush1.msra.mxu0 %v736
        %739 = vmatprep.subr.mxu0 0.0
        %740 = vmatpush1.msra.mxu0 %v735
        %741 = vmatprep.subr.mxu0 0.0
        %742 = vmatpush1.msra.mxu0 %v734
        %743 = vmatprep.subr.mxu0 0.0
        %744 = vmatpush1.msra.mxu0 %v733
        %745 = vmatprep.subr.mxu0 0.0
        %746 = vmatpush1.msra.mxu0 %v732
        %747 = vmatprep.subr.mxu0 0.0
        %748 = vmatpush1.msra.mxu0 %v731
        %749 = vmatprep.subr.mxu0 0.0
        %750 = vmatpush1.msra.mxu0 %v730
        %751 = vmatprep.subr.mxu0 0.0
        %752 = vmatpush1.msra.mxu0 %v729
        %753 = vmatprep.subr.mxu0 0.0
        %754 = vmatpush1.msra.mxu0 %v728
        %755 = vmatprep.subr.mxu0 0.0
        %756 = vmatpush1.msra.mxu0 %v727
        %757 = vmatprep.subr.mxu0 0.0
        %758 = vmatpush1.msra.mxu0 %v726
        %759 = vmatprep.subr.mxu0 0.0
        %760 = vmatpush1.msra.mxu0 %v725
        %761 = vmatprep.subr.mxu0 0.0
        %762 = vmatpush1.msra.mxu0 %v724
        %763 = vmatprep.subr.mxu0 0.0
        %764 = vmatpush1.msra.mxu0 %v723
        %765 = vmatprep.subr.mxu0 0.0
        %766 = vmatpush1.msra.mxu0 %v722
        %767 = vmatprep.subr.mxu0 0.0
        %768 = vmatpush1.msra.mxu0 %v721
        %769 = vmatprep.subr.mxu0 0.0
        %770 = vmatpush2.msra.mxu0 0.0
        %771 = vmatprep.subr.mxu0 0.0
        %772 = vmatpush2.msra.mxu0 0.0
        %773 = vmatprep.subr.mxu0 0.0
        %774 = vmatpush2.msra.mxu0 0.0
        %775 = vmatprep.subr.mxu0 0.0
        %776 = vmatpush2.msra.mxu0 0.0
        %777 = vmatprep.subr.mxu0 0.0
        %778 = vmatpush2.msra.mxu0 0.0
        %779 = vmatprep.subr.mxu0 0.0
        %780 = vmatpush2.msra.mxu0 0.0
        %781 = vmatprep.subr.mxu0 0.0
        %782 = vmatpush2.msra.mxu0 0.0
        %783 = vmatprep.subr.mxu0 0.0
        %784 = vmatpush2.msra.mxu0 0.0
        %785 = vmatprep.subr.mxu0 0.0
        %786 = vmatpush2.msra.mxu0 0.0
        %787 = vmatprep.subr.mxu0 0.0
        %788 = vmatpush2.msra.mxu0 0.0
        %789 = vmatprep.subr.mxu0 0.0
        %790 = vmatpush2.msra.mxu0 0.0
        %791 = vmatprep.subr.mxu0 0.0
        %792 = vmatpush2.msra.mxu0 0.0
        %793 = vmatprep.subr.mxu0 0.0
        %794 = vmatpush2.msra.mxu0 0.0
        %795 = vmatprep.subr.mxu0 0.0
        %796 = vmatpush2.msra.mxu0 0.0
        %797 = vmatprep.subr.mxu0 0.0
        %798 = vmatpush2.msra.mxu0 0.0
        %799 = vmatprep.subr.mxu0 0.0
        %800 = vmatpush2.msra.mxu0 0.0
        %801 = vmatprep.mubr.f32.mxu0 0.0
        %802 = vmatmul.mubr.f32.gmra.mxu0 %v720
        %v803 = vpop.f32.mrf.mxu0
        %v804 = vadd.f32 0.0, %v803
        %v805 = vpop.f32.mrf.mxu0
        %806 = vdwg.mxu0
        %v807 = vadd.f32 %v709, %v804
        %v808 = vmul.f32 %v807, %v519
        %v809 = vld [vmem:[%s247 + $0x200] sm:$0xff]
        %v810 = vld [vmem:[%s247 + $0x208] sm:$0xff]
        %v811 = vld [vmem:[%s247 + $0x210] sm:$0xff]
        %v812 = vld [vmem:[%s247 + $0x218] sm:$0xff]
        %v813 = vld [vmem:[%s247 + $0x220] sm:$0xff]
        %v814 = vld [vmem:[%s247 + $0x228] sm:$0xff]
        %v815 = vld [vmem:[%s247 + $0x230] sm:$0xff]
        %v816 = vld [vmem:[%s247 + $0x238] sm:$0xff]
        %v817 = vld [vmem:[%s247 + $0x240] sm:$0xff]
        %v818 = vld [vmem:[%s247 + $0x248] sm:$0xff]
        %v819 = vld [vmem:[%s247 + $0x250] sm:$0xff]
        %v820 = vld [vmem:[%s247 + $0x258] sm:$0xff]
        %v821 = vld [vmem:[%s247 + $0x260] sm:$0xff]
        %v822 = vld [vmem:[%s247 + $0x268] sm:$0xff]
        %v823 = vld [vmem:[%s247 + $0x270] sm:$0xff]
        %v824 = vld [vmem:[%s247 + $0x278] sm:$0xff]
        %825 = vmatprep.subr.mxu0 0.0
        %826 = vmatpush1.msra.mxu0 %v824
        %827 = vmatprep.subr.mxu0 0.0
        %828 = vmatpush1.msra.mxu0 %v823
        %829 = vmatprep.subr.mxu0 0.0
        %830 = vmatpush1.msra.mxu0 %v822
        %831 = vmatprep.subr.mxu0 0.0
        %832 = vmatpush1.msra.mxu0 %v821
        %833 = vmatprep.subr.mxu0 0.0
        %834 = vmatpush1.msra.mxu0 %v820
        %835 = vmatprep.subr.mxu0 0.0
        %836 = vmatpush1.msra.mxu0 %v819
        %837 = vmatprep.subr.mxu0 0.0
        %838 = vmatpush1.msra.mxu0 %v818
        %839 = vmatprep.subr.mxu0 0.0
        %840 = vmatpush1.msra.mxu0 %v817
        %841 = vmatprep.subr.mxu0 0.0
        %842 = vmatpush1.msra.mxu0 %v816
        %843 = vmatprep.subr.mxu0 0.0
        %844 = vmatpush1.msra.mxu0 %v815
        %845 = vmatprep.subr.mxu0 0.0
        %846 = vmatpush1.msra.mxu0 %v814
        %847 = vmatprep.subr.mxu0 0.0
        %848 = vmatpush1.msra.mxu0 %v813
        %849 = vmatprep.subr.mxu0 0.0
        %850 = vmatpush1.msra.mxu0 %v812
        %851 = vmatprep.subr.mxu0 0.0
        %852 = vmatpush1.msra.mxu0 %v811
        %853 = vmatprep.subr.mxu0 0.0
        %854 = vmatpush1.msra.mxu0 %v810
        %855 = vmatprep.subr.mxu0 0.0
        %856 = vmatpush1.msra.mxu0 %v809
        %857 = vmatprep.subr.mxu0 0.0
        %858 = vmatpush2.msra.mxu0 0.0
        %859 = vmatprep.subr.mxu0 0.0
        %860 = vmatpush2.msra.mxu0 0.0
        %861 = vmatprep.subr.mxu0 0.0
        %862 = vmatpush2.msra.mxu0 0.0
        %863 = vmatprep.subr.mxu0 0.0
        %864 = vmatpush2.msra.mxu0 0.0
        %865 = vmatprep.subr.mxu0 0.0
        %866 = vmatpush2.msra.mxu0 0.0
        %867 = vmatprep.subr.mxu0 0.0
        %868 = vmatpush2.msra.mxu0 0.0
        %869 = vmatprep.subr.mxu0 0.0
        %870 = vmatpush2.msra.mxu0 0.0
        %871 = vmatprep.subr.mxu0 0.0
        %872 = vmatpush2.msra.mxu0 0.0
        %873 = vmatprep.subr.mxu0 0.0
        %874 = vmatpush2.msra.mxu0 0.0
        %875 = vmatprep.subr.mxu0 0.0
        %876 = vmatpush2.msra.mxu0 0.0
        %877 = vmatprep.subr.mxu0 0.0
        %878 = vmatpush2.msra.mxu0 0.0
        %879 = vmatprep.subr.mxu0 0.0
        %880 = vmatpush2.msra.mxu0 0.0
        %881 = vmatprep.subr.mxu0 0.0
        %882 = vmatpush2.msra.mxu0 0.0
        %883 = vmatprep.subr.mxu0 0.0
        %884 = vmatpush2.msra.mxu0 0.0
        %885 = vmatprep.subr.mxu0 0.0
        %886 = vmatpush2.msra.mxu0 0.0
        %887 = vmatprep.subr.mxu0 0.0
        %888 = vmatpush2.msra.mxu0 0.0
        %889 = vmatprep.mubr.f32.mxu0 0.0
        %890 = vmatmul.mubr.f32.gmra.mxu0 %v808
        %v891 = vpop.f32.mrf.mxu0
        %v892 = vadd.f32 0.0, %v891
        %v893 = vpop.f32.mrf.mxu0
        %894 = vdwg.mxu0
        %895 = vst [vmem:[%s279] sm:$0xff] %v892
        %s896 = sand.u32 %s125, 1
        %s897 = scalar_lea.sflag [#allocation4], %s896
        %s898 = sand.u32 %s125, 1
        %s899 = smul.addr %s898, 8
        %s900 = scalar_lea.vmem [#allocation8], %s899
        // Predicated region
        $region45: #{tpu_custom_call.1} parent=31 // pred_check
          %p901 = pneg %p135
        $region46: #{tpu_custom_call.1} parent=31 // pred_check_branch
          %903 = sbr.rel (%p901) target = $region48
        $region47: #{tpu_custom_call.1} parent=31 // pred_region
          %s905 = ssub.s32 128, 128
          %906 = vsyncadd %s897, %s905
          %s907 = sadd.s32 %s28, %s27
          %s908 = smul.addr %s907, 128
          %s909 = scalar_lea.hbm %s3, %s908
          %s911 = sshll.u32 %s900, 4
          %s912 = int_to_ptr.vmem [resolvable:$true] %s911
          %914 = dma.vmem_to_hbm [thread:$0]  %s912, 128, %s909, %s897
        $region48: #{tpu_custom_call.1} parent=31 // pred_fallthru
          _
      $region32: #{tpu_custom_call.1} parent=5 // pred_fallthru
        _
      %p915 = scmp.le.s32.totalorder 2, %s18
      // Predicated region
      $region49: #{tpu_custom_call.1} parent=5 // pred_check
        %p916 = pneg %p915
      $region50: #{tpu_custom_call.1} parent=5 // pred_check_branch
        %918 = sbr.rel (%p916) target = $region52
      $region51: #{tpu_custom_call.1} parent=5 // pred_region
        %s919 = ssub.s32 %s18, 2
        // Predicated region
        $region53: #{tpu_custom_call.1} parent=51 // pred_check
          %p920 = pneg %p141
        $region54: #{tpu_custom_call.1} parent=51 // pred_check_branch
          %922 = sbr.rel (%p920) target = $region56
        $region55: #{tpu_custom_call.1} parent=51 // pred_region
          %s923 = sand.u32 %s126, 1
          %s924 = scalar_lea.sflag [#allocation4], %s923
          %s925 = sand.u32 %s126, 1
          %s926 = smul.addr %s925, 8
          %s927 = scalar_lea.vmem [#allocation8], %s926
          %928 = dma.done %s924, 128
        $region56: #{tpu_custom_call.1} parent=51 // pred_fallthru
          _
      $region52: #{tpu_custom_call.1} parent=5 // pred_fallthru
        _
    $region6: #{tpu_custom_call.1} parent=1 // loop_footer
      %s22 = sadd.s32 1, %s18
    $region7: #{tpu_custom_call.1} parent=1 // loop_footer_branch
      %17 = sbr.rel target = $region3
    $region8: #{tpu_custom_call.1} parent=1 // loop_exit
      _
    %929 = vsyncpa [#allocation3], 1
    %s930 = scalar_lea.sflag [#allocation3], 1
    %931 = vsyncpa %s930, 1
    %932 = vsyncpa [#allocation6], 1
    %s933 = scalar_lea.sflag [#allocation6], 1
    %934 = vsyncpa %s933, 1
    %935 = vsyncpa [#allocation4], 1
    %s936 = scalar_lea.sflag [#allocation4], 1
    %937 = vsyncpa %s936, 1

</llo_original>
